<compile_context>
chip_gen: v7x
topology: tpu7x:2x2x1
jax: 0.10.0
libtpu: 0.0.40
codegen_flags: <defaults>
</compile_context>

<pallas_src>
import functools

import jax
import jax.numpy as jnp
from jax.experimental import pallas as pl
from jax.experimental.pallas import tpu as pltpu

LANE = 128     # TPU lane width (last-dim tile)
SUBLANE = 8    # TPU sublane width (second-to-last-dim tile)


def _round_up(n, m):
    return ((n + m - 1) // m) * m


def attention_kernel(x_ref, w1_ref, b1_ref, w2_ref, b2_ref, o_ref):
    # One (tile_b, F) row-tile per grid step.  Both matmuls, tanh, the stable
    # softmax reduction and the elementwise product all live in VMEM/vregs.
    # Activations are cast to the weights' dtype (bf16 by default) so the MXU
    # runs at its native rate; accumulation is f32.
    x = x_ref[...].astype(w1_ref.dtype)

    # linear1 + tanh  (f32 accumulate, f32 bias/activation)
    h = jnp.tanh(
        jnp.dot(x, w1_ref[...], preferred_element_type=jnp.float32) + b1_ref[...]
    )

    # linear2
    y = (
        jnp.dot(h.astype(w2_ref.dtype), w2_ref[...],
                preferred_element_type=jnp.float32)
        + b2_ref[...]
    )

    # Numerically stable softmax over the feature axis (dim=1), exact divide
    # (one divide per row — negligible, and avoids approx-reciprocal error).
    m = jnp.max(y, axis=1, keepdims=True)
    e = jnp.exp(y - m)
    p = e / jnp.sum(e, axis=1, keepdims=True)

    # attention_params * y
    o_ref[...] = (p * y).astype(o_ref.dtype)


def prepare_params(w1, b1, w2, b2, matmul_dtype=jnp.bfloat16):
    """One-time layout work, hoisted out of the forward path.

    PyTorch-style (out, in) weights -> pre-transposed (in, out) in the matmul
    dtype (bf16 by default, per perf review; pass jnp.float32 for exact f32
    matmuls).  Biases stay f32, shaped (1, F) for a sublane broadcast.
    """
    w1t = jnp.asarray(w1, jnp.float32).T.astype(matmul_dtype)
    w2t = jnp.asarray(w2, jnp.float32).T.astype(matmul_dtype)
    b1p = jnp.asarray(b1, jnp.float32).reshape(1, -1)
    b2p = jnp.asarray(b2, jnp.float32).reshape(1, -1)
    return w1t, b1p, w2t, b2p


@functools.partial(jax.jit, static_argnames=("max_tile_b",))
def attention_forward(x, w1t, b1p, w2t, b2p, *, max_tile_b=4096):
    B, F = x.shape

    # Row-tile selection:
    #  * tiny batches: a single full-extent block (legal even if B % 8 != 0);
    #  * otherwise: split the batch across >= 2 grid steps (so both v7x
    #    TensorCores get work under dimension_semantics=("parallel",)), capped
    #    at max_tile_b rows to amortize per-step overhead.  Partial final
    #    blocks are handled by Pallas (reads padded, OOB writes masked) and the
    #    per-row softmax keeps padded rows from contaminating real ones.
    if B <= SUBLANE:
        tile_b = B
    else:
        tile_b = min(max_tile_b, _round_up(pl.cdiv(B, 2), SUBLANE))
    steps = pl.cdiv(B, tile_b)

    if steps >= 4:
        # Deeper input buffering hides HBM jitter on long grids.
        x_spec = pl.BlockSpec((tile_b, F), lambda i: (i, 0),
                              pipeline_mode=pl.Buffered(3))
    else:
        x_spec = pl.BlockSpec((tile_b, F), lambda i: (i, 0))

    return pl.pallas_call(
        attention_kernel,
        out_shape=jax.ShapeDtypeStruct((B, F), jnp.float32),
        grid=(steps,),
        in_specs=[
            x_spec,                                      # x: tiled over batch
            pl.BlockSpec((F, F), lambda i: (0, 0)),      # W1^T: VMEM-resident
            pl.BlockSpec((1, F), lambda i: (0, 0)),      # b1
            pl.BlockSpec((F, F), lambda i: (0, 0)),      # W2^T
            pl.BlockSpec((1, F), lambda i: (0, 0)),      # b2
        ],
        out_specs=pl.BlockSpec((tile_b, F), lambda i: (i, 0)),
        compiler_params=pltpu.CompilerParams(
            dimension_semantics=("parallel",),           # megacore on v7x
        ),
    )(x, w1t, b1p, w2t, b2p)


def attention_reference(x, w1, b1, w2, b2):
    # True f32 reference (HIGHEST precision so the TPU default bf16 matmul
    # path doesn't blur the comparison).
    hp = jax.lax.Precision.HIGHEST
    h = jnp.tanh(jnp.dot(x, w1.T, precision=hp) + b1)
    y = jnp.dot(h, w2.T, precision=hp) + b2
    p = jax.nn.softmax(y, axis=1)
    return p * y


if __name__ == "__main__":
    B, F = 8, 32  # small shapes consistent with Attention(features=32)

    key = jax.random.PRNGKey(0)
    kx, kw1, kb1, kw2, kb2 = jax.random.split(key, 5)

    # Deterministic init mimicking nn.Linear default: U(-1/sqrt(F), 1/sqrt(F))
    bound = 1.0 / jnp.sqrt(jnp.float32(F))
    x = jax.random.normal(kx, (B, F), dtype=jnp.float32)
    w1 = jax.random.uniform(kw1, (F, F), jnp.float32, -bound, bound)  # (out, in)
    b1 = jax.random.uniform(kb1, (F,), jnp.float32, -bound, bound)
    w2 = jax.random.uniform(kw2, (F, F), jnp.float32, -bound, bound)
    b2 = jax.random.uniform(kb2, (F,), jnp.float32, -bound, bound)

    ref = attention_reference(x, w1, b1, w2, b2)

    # Recommended config: bf16 matmul operands, f32 accumulation / everything else.
    params_bf16 = prepare_params(w1, b1, w2, b2)               # bf16 weights
    out = jax.block_until_ready(attention_forward(x, *params_bf16))
    assert out.shape == (B, F)
    # bf16 operands perturb the logits by ~1e-3 at these scales; 1e-2 is ample.
    assert jnp.allclose(out, ref, atol=1e-2, rtol=1e-2), "bf16 kernel mismatch"

    # Exact-semantics config: f32 weights (matmul dtype is a no-op cast).
    params_f32 = prepare_params(w1, b1, w2, b2, matmul_dtype=jnp.float32)
    out32 = jax.block_until_ready(attention_forward(x, *params_f32))
    assert jnp.allclose(out32, ref, atol=5e-3, rtol=5e-3), "f32 kernel mismatch"

    print("KERNEL_OK")
</pallas_src>

<mosaic_0001>
module attributes {stable_mosaic.version = 11 : i64} {
  func.func @attention_kernel(%arg0: i32, %arg1: memref<8x32xf32, #tpu.memory_space<vmem>>, %arg2: memref<32x32xbf16, #tpu.memory_space<vmem>>, %arg3: memref<1x32xf32, #tpu.memory_space<vmem>>, %arg4: memref<32x32xbf16, #tpu.memory_space<vmem>>, %arg5: memref<1x32xf32, #tpu.memory_space<vmem>>, %arg6: memref<8x32xf32, #tpu.memory_space<vmem>>) attributes {dimension_semantics = [#tpu.dimension_semantics<parallel>], iteration_bounds = array<i64: 1>, scalar_prefetch = 0 : i64, scratch_operands = 0 : i64, tpu.core_type = #tpu.core_type<tc>, window_params = [{transform_indices = @transform_0, window_bounds = array<i64: 8, 32>}, {pipeline_mode = #tpu.pipeline_mode<synchronous>, transform_indices = @transform_1, window_bounds = array<i64: 32, 32>}, {pipeline_mode = #tpu.pipeline_mode<synchronous>, transform_indices = @transform_2, window_bounds = array<i64: 1, 32>}, {pipeline_mode = #tpu.pipeline_mode<synchronous>, transform_indices = @transform_3, window_bounds = array<i64: 32, 32>}, {pipeline_mode = #tpu.pipeline_mode<synchronous>, transform_indices = @transform_4, window_bounds = array<i64: 1, 32>}, {transform_indices = @transform_5, window_bounds = array<i64: 8, 32>}]} {
    %c0 = arith.constant 0 : index
    %c0_0 = arith.constant 0 : index
    %0 = vector.load %arg1[%c0, %c0_0] : memref<8x32xf32, #tpu.memory_space<vmem>>, vector<8x32xf32>
    %1 = arith.truncf %0 : vector<8x32xf32> to vector<8x32xbf16>
    %c0_1 = arith.constant 0 : index
    %c0_2 = arith.constant 0 : index
    %2 = vector.load %arg2[%c0_1, %c0_2] : memref<32x32xbf16, #tpu.memory_space<vmem>>, vector<32x32xbf16>
    %cst = arith.constant dense<0.000000e+00> : vector<8x32xf32>
    %3 = tpu.matmul %1, %2, %cst {dimension_numbers = #tpu.dot_dimension_numbers<[1], [0], [0], [1], [0, 0, 1, 1], [], []>} : vector<8x32xbf16>, vector<32x32xbf16>, vector<8x32xf32> -> vector<8x32xf32>
    %c0_3 = arith.constant 0 : index
    %c0_4 = arith.constant 0 : index
    %4 = vector.load %arg3[%c0_3, %c0_4] : memref<1x32xf32, #tpu.memory_space<vmem>>, vector<1x32xf32>
    %5 = vector.broadcast %4 : vector<1x32xf32> to vector<8x32xf32>
    %6 = arith.addf %3, %5 : vector<8x32xf32>
    %7 = math.tanh %6 : vector<8x32xf32>
    %8 = arith.truncf %7 : vector<8x32xf32> to vector<8x32xbf16>
    %c0_5 = arith.constant 0 : index
    %c0_6 = arith.constant 0 : index
    %9 = vector.load %arg4[%c0_5, %c0_6] : memref<32x32xbf16, #tpu.memory_space<vmem>>, vector<32x32xbf16>
    %cst_7 = arith.constant dense<0.000000e+00> : vector<8x32xf32>
    %10 = tpu.matmul %8, %9, %cst_7 {dimension_numbers = #tpu.dot_dimension_numbers<[1], [0], [0], [1], [0, 0, 1, 1], [], []>} : vector<8x32xbf16>, vector<32x32xbf16>, vector<8x32xf32> -> vector<8x32xf32>
    %c0_8 = arith.constant 0 : index
    %c0_9 = arith.constant 0 : index
    %11 = vector.load %arg5[%c0_8, %c0_9] : memref<1x32xf32, #tpu.memory_space<vmem>>, vector<1x32xf32>
    %12 = vector.broadcast %11 : vector<1x32xf32> to vector<8x32xf32>
    %13 = arith.addf %10, %12 : vector<8x32xf32>
    %cst_10 = arith.constant dense<0xFF800000> : vector<8xf32>
    %14 = vector.multi_reduction <maximumf>, %13, %cst_10 [1] : vector<8x32xf32> to vector<8xf32>
    %15 = vector.shape_cast %14 : vector<8xf32> to vector<8x1xf32>
    %16 = vector.broadcast %15 : vector<8x1xf32> to vector<8x32xf32>
    %17 = arith.subf %13, %16 : vector<8x32xf32>
    %18 = math.exp %17 : vector<8x32xf32>
    %cst_11 = arith.constant dense<0.000000e+00> : vector<8xf32>
    %19 = vector.multi_reduction <add>, %18, %cst_11 [1] : vector<8x32xf32> to vector<8xf32>
    %20 = vector.shape_cast %19 : vector<8xf32> to vector<8x1xf32>
    %21 = vector.broadcast %20 : vector<8x1xf32> to vector<8x32xf32>
    %22 = arith.divf %18, %21 : vector<8x32xf32>
    %23 = arith.mulf %22, %13 : vector<8x32xf32>
    %c0_12 = arith.constant 0 : index
    %c0_13 = arith.constant 0 : index
    %24 = vector.load %arg6[%c0_12, %c0_13] : memref<8x32xf32, #tpu.memory_space<vmem>>, vector<8x32xf32>
    tpu.vector_store %arg6[%c0_12, %c0_13], %23 {strides = array<i32>} : memref<8x32xf32, #tpu.memory_space<vmem>>, vector<8x32xf32>,
    return
  }
  func.func @transform_0(%arg0: i32) -> (i32, i32) {
    %c0_i32 = arith.constant 0 : i32
    %c0_i32_0 = arith.constant 0 : i32
    return %arg0, %c0_i32 : i32, i32
  }
  func.func @transform_1(%arg0: i32) -> (i32, i32) {
    %c0_i32 = arith.constant 0 : i32
    %c0_i32_0 = arith.constant 0 : i32
    %c0_i32_1 = arith.constant 0 : i32
    return %c0_i32, %c0_i32_0 : i32, i32
  }
  func.func @transform_2(%arg0: i32) -> (i32, i32) {
    %c0_i32 = arith.constant 0 : i32
    %c0_i32_0 = arith.constant 0 : i32
    %c0_i32_1 = arith.constant 0 : i32
    return %c0_i32, %c0_i32_0 : i32, i32
  }
  func.func @transform_3(%arg0: i32) -> (i32, i32) {
    %c0_i32 = arith.constant 0 : i32
    %c0_i32_0 = arith.constant 0 : i32
    %c0_i32_1 = arith.constant 0 : i32
    return %c0_i32, %c0_i32_0 : i32, i32
  }
  func.func @transform_4(%arg0: i32) -> (i32, i32) {
    %c0_i32 = arith.constant 0 : i32
    %c0_i32_0 = arith.constant 0 : i32
    %c0_i32_1 = arith.constant 0 : i32
    return %c0_i32, %c0_i32_0 : i32, i32
  }
  func.func @transform_5(%arg0: i32) -> (i32, i32) {
    %c0_i32 = arith.constant 0 : i32
    %c0_i32_0 = arith.constant 0 : i32
    return %arg0, %c0_i32 : i32, i32
  }
}

</mosaic_0001>

<llo_original>
// kernel: attention_forward.1
$region0: #{attention_forward.1}
  #allocation0 [shape = 'u32[]', space=smem, size = 0x4, offset = 0x4, fixed_abs, tag = 'smem constant byte address 0x4 - core index']
  #allocation1 [shape = 'u32[144,128]{1,0:T(1,128)}', space=vmem, size = 0x12000, scoped, tag = 'internal scratch']
  %s0 = inlined_call_operand.hbm [shape: f32[8,32], index: 0, kind: input, shape index: {}]
  %s1 = inlined_call_operand.hbm [shape: bf16[32,32], index: 1, kind: input, shape index: {}]
  %s2 = inlined_call_operand.vmem [shape: f32[1,32], index: 2, kind: input, shape index: {}]
  %s3 = inlined_call_operand.hbm [shape: bf16[32,32], index: 3, kind: input, shape index: {}]
  %s4 = inlined_call_operand.vmem [shape: f32[1,32], index: 4, kind: input, shape index: {}]
  %s5 = inlined_call_operand.hbm [shape: f32[8,32], index: 5, kind: output, shape index: {}]
  %s6 = sld [smem:[#allocation0]]
  $region42: #{attention_forward.1} parent=0
    _
  %s8 = ssub.s32 1, %s6
  %s9 = scalar_select 0, %s8, %s6
  $region1: #{attention_forward.1} parent=0
    #allocation2 [shape = 'u8[4096]{0}', space=vmem, size = 0x1000, scoped, tag = 'input window, operand 0, single buffered']
    #allocation3 [shape = 's32[1]{0}', space=sflag, size = 0x4, scoped, tag = 'scoped memory for attention_forward.1']
    #allocation4 [shape = 's32[1]{0}', space=sflag, size = 0x4, scoped, tag = 'scoped memory for attention_forward.1']
    #allocation5 [shape = 'u8[8192]{0}', space=vmem, size = 0x2000, scoped, tag = 'input window, operand 1, single buffered']
    #allocation6 [shape = 's32[1]{0}', space=sflag, size = 0x4, scoped, tag = 'scoped memory for attention_forward.1']
    #allocation7 [shape = 'u8[8192]{0}', space=vmem, size = 0x2000, scoped, tag = 'input window, operand 3, single buffered']
    #allocation8 [shape = 'u8[4096]{0}', space=vmem, size = 0x1000, scoped, tag = 'output window, operand 0, single buffered']
    %10 = vsyncpa [#allocation3], 0
    %11 = vsyncpa [#allocation6], 0
    %12 = vsyncpa [#allocation4], 0
    // Predicated region
    $region2: #{attention_forward.1} parent=1 // pred_check
      _
    $region3: #{attention_forward.1} parent=1 // pred_check_branch
      %14 = sbr.rel (0) target = $region5
    $region4: #{attention_forward.1} parent=1 // pred_region
      %s16 = ssub.s32 128, 128
      %17 = vsyncadd [#allocation3], %s16
      %s19 = sshll.u32 [#allocation2], 4
      %s20 = int_to_ptr.vmem [resolvable:$true] %s19
      %22 = dma.hbm_to_vmem [thread:$0]  %s0, 128, %s20, [#allocation3]
    $region5: #{attention_forward.1} parent=1 // pred_fallthru
      _
    // Predicated region
    $region6: #{attention_forward.1} parent=1 // pred_check
      _
    $region7: #{attention_forward.1} parent=1 // pred_check_branch
      %24 = sbr.rel (0) target = $region9
    $region8: #{attention_forward.1} parent=1 // pred_region
      %s26 = ssub.s32 256, 256
      %27 = vsyncadd [#allocation6], %s26
      %s28 = sshll.u32 [#allocation5], 4
      %s29 = int_to_ptr.vmem [resolvable:$true] %s28
      %34 = dma.hbm_to_vmem [thread:$0]  %s1, 256, %s29, [#allocation6], 64, 64, 4
    $region9: #{attention_forward.1} parent=1 // pred_fallthru
      _
    // Predicated region
    $region10: #{attention_forward.1} parent=1 // pred_check
      _
    $region11: #{attention_forward.1} parent=1 // pred_check_branch
      %36 = sbr.rel (0) target = $region13
    $region12: #{attention_forward.1} parent=1 // pred_region
      _
    $region13: #{attention_forward.1} parent=1 // pred_fallthru
      _
    // Predicated region
    $region14: #{attention_forward.1} parent=1 // pred_check
      _
    $region15: #{attention_forward.1} parent=1 // pred_check_branch
      %38 = sbr.rel (0) target = $region17
    $region16: #{attention_forward.1} parent=1 // pred_region
      %s40 = ssub.s32 256, 256
      %41 = vsyncadd [#allocation6], %s40
      %s42 = sshll.u32 [#allocation7], 4
      %s43 = int_to_ptr.vmem [resolvable:$true] %s42
      %48 = dma.hbm_to_vmem [thread:$0]  %s3, 256, %s43, [#allocation6], 64, 64, 4
    $region17: #{attention_forward.1} parent=1 // pred_fallthru
      _
    // Predicated region
    $region18: #{attention_forward.1} parent=1 // pred_check
      _
    $region19: #{attention_forward.1} parent=1 // pred_check_branch
      %50 = sbr.rel (0) target = $region21
    $region20: #{attention_forward.1} parent=1 // pred_region
      _
    $region21: #{attention_forward.1} parent=1 // pred_fallthru
      _
    // Predicated region
    $region22: #{attention_forward.1} parent=1 // pred_check
      _
    $region23: #{attention_forward.1} parent=1 // pred_check_branch
      %52 = sbr.rel (0) target = $region25
    $region24: #{attention_forward.1} parent=1 // pred_region
      %53 = dma.done [#allocation3], 128
    $region25: #{attention_forward.1} parent=1 // pred_fallthru
      _
    // Predicated region
    $region26: #{attention_forward.1} parent=1 // pred_check
      _
    $region27: #{attention_forward.1} parent=1 // pred_check_branch
      %55 = sbr.rel (0) target = $region29
    $region28: #{attention_forward.1} parent=1 // pred_region
      %56 = dma.done [#allocation6], 256
    $region29: #{attention_forward.1} parent=1 // pred_fallthru
      _
    // Predicated region
    $region30: #{attention_forward.1} parent=1 // pred_check
      _
    $region31: #{attention_forward.1} parent=1 // pred_check_branch
      %58 = sbr.rel (0) target = $region33
    $region32: #{attention_forward.1} parent=1 // pred_region
      %59 = dma.done [#allocation6], 256
    $region33: #{attention_forward.1} parent=1 // pred_fallthru
      _
    %v61 = vld [vmem:[#allocation2] sm:$0xff]
    %v62 = vpack.c.bf16 %v61, %v61
    %v63 = vld [vmem:[#allocation5] sm:$0xf]
    %v64 = vld [vmem:[#allocation5 + $0x4] sm:$0xf]
    %v65 = vld [vmem:[#allocation5 + $0x8] sm:$0xf]
    %v66 = vld [vmem:[#allocation5 + $0xc] sm:$0xf]
    %v67 = vld [vmem:[%s2] sm:$0x1]
    %v69 = vlaneseq
    %v70 = vshrl.u32 %v69, 7
    %v71 = vsub.s32 0, %v70
    %v72 = vrot.slane %v67, %v71
    %v78 = vunpack.c.l.b16 %v63
    %v79 = vunpack.c.l.b16 %v64
    %v80 = vunpack.c.l.b16 %v65
    %v81 = vunpack.c.l.b16 %v66
    %v82 = vpack.c.b16 %v79, %v78
    %v83 = vpack.c.b16 %v81, %v80
    %vm86 = vcmask 261120
    %v88 = vsel %vm86, %v62, 0
    %90 = vmatprep.subr.bf16.mxu0 0
    %91 = vmatpush1.bf16.msra.mxu0 %v82
    %92 = vmatprep.subr.bf16.mxu0 0
    %93 = vmatpush1.bf16.msra.mxu0 %v83
    %94 = vmatprep.subr.bf16.mxu0 0
    %95 = vmatpush1.bf16.msra.mxu0 0
    %96 = vmatprep.subr.bf16.mxu0 0
    %97 = vmatpush1.bf16.msra.mxu0 0
    %98 = vmatprep.subr.bf16.mxu0 0
    %99 = vmatpush1.bf16.msra.mxu0 0
    %100 = vmatprep.subr.bf16.mxu0 0
    %101 = vmatpush1.bf16.msra.mxu0 0
    %102 = vmatprep.subr.bf16.mxu0 0
    %103 = vmatpush1.bf16.msra.mxu0 0
    %104 = vmatprep.subr.bf16.mxu0 0
    %105 = vmatpush1.bf16.msra.mxu0 0
    %106 = vmatprep.subr.bf16.mxu0 0
    %107 = vmatpush1.bf16.msra.mxu0 0
    %108 = vmatprep.subr.bf16.mxu0 0
    %109 = vmatpush1.bf16.msra.mxu0 0
    %110 = vmatprep.subr.bf16.mxu0 0
    %111 = vmatpush1.bf16.msra.mxu0 0
    %112 = vmatprep.subr.bf16.mxu0 0
    %113 = vmatpush1.bf16.msra.mxu0 0
    %114 = vmatprep.subr.bf16.mxu0 0
    %115 = vmatpush1.bf16.msra.mxu0 0
    %116 = vmatprep.subr.bf16.mxu0 0
    %117 = vmatpush1.bf16.msra.mxu0 0
    %118 = vmatprep.subr.bf16.mxu0 0
    %119 = vmatpush1.bf16.msra.mxu0 0
    %120 = vmatprep.subr.bf16.mxu0 0
    %121 = vmatpush1.bf16.msra.mxu0 0
    %122 = vmatprep.mubr.bf16.mxu0 0
    %123 = vmatmul.mubr.bf16.gmra.mrb[0].mxu0 %v88
    %v124 = vpop.f32.mrb[0].mxu0
    %v125 = vadd.f32 %v72, %v124
    %v126 = vpop.f32.mrb[0].mxu0
    %v127 = vpop.f32.mrb[0].mxu0
    %v128 = vpop.f32.mrb[0].mxu0
    %129 = vdwg.mxu0
    %v130 = vtanh.pop %v125
    %v131 = vpack.c.bf16 %v130, %v130
    %v132 = vld [vmem:[#allocation7] sm:$0xf]
    %v133 = vld [vmem:[#allocation7 + $0x4] sm:$0xf]
    %v134 = vld [vmem:[#allocation7 + $0x8] sm:$0xf]
    %v135 = vld [vmem:[#allocation7 + $0xc] sm:$0xf]
    %v136 = vld [vmem:[%s4] sm:$0x1]
    %v138 = vlaneseq
    %v139 = vshrl.u32 %v138, 7
    %v140 = vsub.s32 0, %v139
    %v141 = vrot.slane %v136, %v140
    %v147 = vunpack.c.l.b16 %v132
    %v148 = vunpack.c.l.b16 %v133
    %v149 = vunpack.c.l.b16 %v134
    %v150 = vunpack.c.l.b16 %v135
    %v151 = vpack.c.b16 %v148, %v147
    %v152 = vpack.c.b16 %v150, %v149
    %v156 = vsel %vm86, %v131, 0
    %158 = vmatprep.subr.bf16.mxu0 0
    %159 = vmatpush1.bf16.msra.mxu0 %v151
    %160 = vmatprep.subr.bf16.mxu0 0
    %161 = vmatpush1.bf16.msra.mxu0 %v152
    %162 = vmatprep.subr.bf16.mxu0 0
    %163 = vmatpush1.bf16.msra.mxu0 0
    %164 = vmatprep.subr.bf16.mxu0 0
    %165 = vmatpush1.bf16.msra.mxu0 0
    %166 = vmatprep.subr.bf16.mxu0 0
    %167 = vmatpush1.bf16.msra.mxu0 0
    %168 = vmatprep.subr.bf16.mxu0 0
    %169 = vmatpush1.bf16.msra.mxu0 0
    %170 = vmatprep.subr.bf16.mxu0 0
    %171 = vmatpush1.bf16.msra.mxu0 0
    %172 = vmatprep.subr.bf16.mxu0 0
    %173 = vmatpush1.bf16.msra.mxu0 0
    %174 = vmatprep.subr.bf16.mxu0 0
    %175 = vmatpush1.bf16.msra.mxu0 0
    %176 = vmatprep.subr.bf16.mxu0 0
    %177 = vmatpush1.bf16.msra.mxu0 0
    %178 = vmatprep.subr.bf16.mxu0 0
    %179 = vmatpush1.bf16.msra.mxu0 0
    %180 = vmatprep.subr.bf16.mxu0 0
    %181 = vmatpush1.bf16.msra.mxu0 0
    %182 = vmatprep.subr.bf16.mxu0 0
    %183 = vmatpush1.bf16.msra.mxu0 0
    %184 = vmatprep.subr.bf16.mxu0 0
    %185 = vmatpush1.bf16.msra.mxu0 0
    %186 = vmatprep.subr.bf16.mxu0 0
    %187 = vmatpush1.bf16.msra.mxu0 0
    %188 = vmatprep.subr.bf16.mxu0 0
    %189 = vmatpush1.bf16.msra.mxu0 0
    %190 = vmatprep.mubr.bf16.mxu0 0
    %191 = vmatmul.mubr.bf16.gmra.mrb[0].mxu0 %v156
    %v192 = vpop.f32.mrb[0].mxu0
    %v193 = vadd.f32 %v141, %v192
    %v194 = vpop.f32.mrb[0].mxu0
    %v195 = vpop.f32.mrb[0].mxu0
    %v196 = vpop.f32.mrb[0].mxu0
    %197 = vdwg.mxu0
    %v198 = vsel %vm86, %v193, -inf
    %199 = vmax.xlane.f32.xlu0 %v198
    %v200 = vpop.xlane.xlu0 %199
    %v201 = vsub.f32 %v193, %v200
    %v202 = vmul.f32 %v201, 1.442695
    %v203 = vpow.pop %v202
    %v204 = vsel %vm86, %v203, 0.0
    %205 = vadd.xlane.f32.xlu0 %v204
    %v206 = vpop.xlane.xlu0 %205
    %v207 = vrcp.pop %v206
    %v208 = vmul.f32 %v203, %v207
    %v209 = vmul.f32 %v208, %v193
    %210 = vst.msk [vmem:[#allocation8] sm:$0xff] %vm86, %v209
    // Predicated region
    $region34: #{attention_forward.1} parent=1 // pred_check
      _
    $region35: #{attention_forward.1} parent=1 // pred_check_branch
      %212 = sbr.rel (0) target = $region37
    $region36: #{attention_forward.1} parent=1 // pred_region
      %s214 = ssub.s32 128, 128
      %215 = vsyncadd [#allocation4], %s214
      %s217 = sshll.u32 [#allocation8], 4
      %s218 = int_to_ptr.vmem [resolvable:$true] %s217
      %220 = dma.vmem_to_hbm [thread:$0]  %s218, 128, %s5, [#allocation4]
    $region37: #{attention_forward.1} parent=1 // pred_fallthru
      _
    // Predicated region
    $region38: #{attention_forward.1} parent=1 // pred_check
      _
    $region39: #{attention_forward.1} parent=1 // pred_check_branch
      %222 = sbr.rel (0) target = $region41
    $region40: #{attention_forward.1} parent=1 // pred_region
      %223 = dma.done [#allocation4], 128
    $region41: #{attention_forward.1} parent=1 // pred_fallthru
      _
    %224 = vsyncpa [#allocation3], 1
    %225 = vsyncpa [#allocation6], 1
    %226 = vsyncpa [#allocation4], 1

</llo_original>
